<compile_context>
chip_gen: v7x
topology: tpu7x:2x2x1
jax: 0.10.0
libtpu: 0.0.40
codegen_flags: <defaults>
</compile_context>

<pallas_src>
import jax
import jax.numpy as jnp
from jax.experimental import pallas as pl
from jax.experimental.pallas import tpu as pltpu

HIDDEN = 30        # self.hidden_size
NUM_CLASSES = 3    # self.num_classes
TB = 8192          # default batch tile (rows per grid step); primary tuning knob


def _round_up(n, m):
    return ((n + m - 1) // m) * m


def _cdiv(a, b):
    return (a + b - 1) // b


def mlp_dc_kernel(x_ref, w_ref, b_ref, out_ref):
    x = x_ref[...]                         # (tile, 30) f32, VMEM
    w = w_ref[...]                         # (3, 30)    f32, VMEM (resident)

    # fc2 as three per-class f32 dot products on the VPU/XLU (multiply +
    # lane-reduce); avoids the multi-pass f32 MXU path for a K=30, N=3 matmul.
    l0 = jnp.sum(x * w[0:1, :], axis=-1, keepdims=True) + b_ref[0]
    l1 = jnp.sum(x * w[1:2, :], axis=-1, keepdims=True) + b_ref[1]
    l2 = jnp.sum(x * w[2:3, :], axis=-1, keepdims=True) + b_ref[2]

    # Numerically stable softmax over the 3 classes, fully elementwise.
    m = jnp.maximum(jnp.maximum(l0, l1), l2)
    e0 = jnp.exp(l0 - m)
    e1 = jnp.exp(l1 - m)
    e2 = jnp.exp(l2 - m)
    inv = pl.reciprocal(e0 + e1 + e2, approx=False)   # exact: keeps 1e-5 tol

    out_ref[:, 0:1] = e0 * inv
    out_ref[:, 1:2] = e1 * inv
    out_ref[:, 2:3] = e2 * inv


def mlp_dc_forward(x, w, b, *, tb=TB):
    """x: (B, 30) f32.  w: (3, 30) (PyTorch Linear layout).  b: (3,).  -> (B, 3)."""
    B = x.shape[0]
    tb = max(8, min(_round_up(tb, 8), 16384))

    # --- batch tile selection (no padding / copying of x) --------------------
    if B <= tb:
        tile = _round_up(B, 8)               # whole batch in a single grid step
    else:
        tile = tb
        # Keep >= 4 grid steps for dual-TC (v7x) sharding while each step still
        # moves >= ~1 MiB of real x data (pipeline-overhead amortization).
        while tile > 2048 and _cdiv(B, tile) < 4:
            tile = _round_up(tile // 2, 8)
    num_steps = _cdiv(B, tile)               # ragged tail handled by clamping

    # --- VMEM budget: (tile,30) and (tile,3) blocks both lane-pad to 128 -----
    block_bytes = tile * 128 * 4              # one buffer (input or output)
    vmem_limit = min(max(2 * 2 * block_bytes + (1 << 20), 16 * 1024 * 1024),
                     48 * 1024 * 1024)        # <= ~48 MiB: safe on v7x (64 MiB)

    cost = pl.CostEstimate(
        flops=2 * B * HIDDEN * NUM_CLASSES,
        transcendentals=B * NUM_CLASSES,
        bytes_accessed=4 * B * (HIDDEN + NUM_CLASSES),
    )

    return pl.pallas_call(
        mlp_dc_kernel,
        out_shape=jax.ShapeDtypeStruct((B, NUM_CLASSES), jnp.float32),
        grid=(num_steps,),
        in_specs=[
            pl.BlockSpec((tile, HIDDEN), lambda i: (i, 0)),           # x tile
            pl.BlockSpec((NUM_CLASSES, HIDDEN), lambda i: (0, 0)),    # weights, resident
            pl.BlockSpec(memory_space=pltpu.MemorySpace.SMEM),        # bias scalars
        ],
        out_specs=pl.BlockSpec((tile, NUM_CLASSES), lambda i: (i, 0)),
        compiler_params=pltpu.CompilerParams(
            dimension_semantics=("parallel",),
            vmem_limit_bytes=vmem_limit),
        cost_estimate=cost,
    )(x, w, b)


# ---------------------------------------------------------------------------
# Deterministic parameter init (PyTorch nn.Linear defaults) + pure-JAX reference.
# ---------------------------------------------------------------------------
def init_params(key):
    kw, kb = jax.random.split(key)
    bound = 1.0 / (HIDDEN ** 0.5)
    w = jax.random.uniform(kw, (NUM_CLASSES, HIDDEN), jnp.float32, -bound, bound)
    b = jax.random.uniform(kb, (NUM_CLASSES,), jnp.float32, -bound, bound)
    return w, b


def reference_forward(x, w, b):
    logits = jnp.dot(x, w.T, precision="highest") + b
    return jax.nn.softmax(logits, axis=1)


if __name__ == "__main__":
    key = jax.random.PRNGKey(0)
    kparam, kx1, kx2, kx3 = jax.random.split(key, 4)
    w, b = init_params(kparam)

    # Small, module-consistent shapes: (batch, hidden=30).
    #   (8, default tb)  : single full block
    #   (5, default tb)  : block overshoots batch -> clamped ragged block
    #   (300, tb=128)    : multi-step grid + ragged last block
    checks = [(8, TB, kx1), (5, TB, kx2), (300, 128, kx3)]
    for B, tb, kx in checks:
        x = jax.random.normal(kx, (B, HIDDEN), jnp.float32)
        out = jax.block_until_ready(mlp_dc_forward(x, w, b, tb=tb))
        ref = reference_forward(x, w, b)
        assert out.shape == (B, NUM_CLASSES), (B, out.shape)
        assert jnp.allclose(out, ref, rtol=1e-5, atol=1e-5), \
            (B, tb, float(jnp.max(jnp.abs(out - ref))))

    print("KERNEL_OK")
</pallas_src>

<mosaic_0001>
module attributes {stable_mosaic.version = 11 : i64} {
  func.func @mlp_dc_kernel(%arg0: i32, %arg1: memref<8x30xf32, #tpu.memory_space<vmem>>, %arg2: memref<3x30xf32, #tpu.memory_space<vmem>>, %arg3: memref<3xf32, #tpu.memory_space<smem>>, %arg4: memref<8x3xf32, #tpu.memory_space<vmem>>) attributes {dimension_semantics = [#tpu.dimension_semantics<parallel>], iteration_bounds = array<i64: 1>, scalar_prefetch = 0 : i64, scratch_operands = 0 : i64, tpu.core_type = #tpu.core_type<tc>, window_params = [{transform_indices = @transform_0, window_bounds = array<i64: 8, 30>}, {pipeline_mode = #tpu.pipeline_mode<synchronous>, transform_indices = @transform_1, window_bounds = array<i64: 3, 30>}, {transform_indices = @transform_2, window_bounds = array<i64: 3>}, {transform_indices = @transform_3, window_bounds = array<i64: 8, 3>}]} {
    %c0 = arith.constant 0 : index
    %c0_0 = arith.constant 0 : index
    %0 = vector.load %arg1[%c0, %c0_0] : memref<8x30xf32, #tpu.memory_space<vmem>>, vector<8x30xf32>
    %c0_1 = arith.constant 0 : index
    %c0_2 = arith.constant 0 : index
    %1 = vector.load %arg2[%c0_1, %c0_2] : memref<3x30xf32, #tpu.memory_space<vmem>>, vector<3x30xf32>
    %2 = vector.extract_strided_slice %1 {offsets = [0, 0], sizes = [1, 30], strides = [1, 1]} : vector<3x30xf32> to vector<1x30xf32>
    %3 = vector.broadcast %2 : vector<1x30xf32> to vector<8x30xf32>
    %4 = arith.mulf %0, %3 : vector<8x30xf32>
    %cst = arith.constant dense<0.000000e+00> : vector<8xf32>
    %5 = vector.multi_reduction <add>, %4, %cst [1] : vector<8x30xf32> to vector<8xf32>
    %6 = vector.shape_cast %5 : vector<8xf32> to vector<8x1xf32>
    %c0_3 = arith.constant 0 : index
    %7 = memref.load %arg3[%c0_3] : memref<3xf32, #tpu.memory_space<smem>>
    %8 = vector.broadcast %7 : f32 to vector<8x1xf32>
    %9 = arith.addf %6, %8 : vector<8x1xf32>
    %10 = vector.extract_strided_slice %1 {offsets = [1, 0], sizes = [1, 30], strides = [1, 1]} : vector<3x30xf32> to vector<1x30xf32>
    %11 = vector.broadcast %10 : vector<1x30xf32> to vector<8x30xf32>
    %12 = arith.mulf %0, %11 : vector<8x30xf32>
    %cst_4 = arith.constant dense<0.000000e+00> : vector<8xf32>
    %13 = vector.multi_reduction <add>, %12, %cst_4 [1] : vector<8x30xf32> to vector<8xf32>
    %14 = vector.shape_cast %13 : vector<8xf32> to vector<8x1xf32>
    %c1 = arith.constant 1 : index
    %15 = memref.load %arg3[%c1] : memref<3xf32, #tpu.memory_space<smem>>
    %16 = vector.broadcast %15 : f32 to vector<8x1xf32>
    %17 = arith.addf %14, %16 : vector<8x1xf32>
    %18 = vector.extract_strided_slice %1 {offsets = [2, 0], sizes = [1, 30], strides = [1, 1]} : vector<3x30xf32> to vector<1x30xf32>
    %19 = vector.broadcast %18 : vector<1x30xf32> to vector<8x30xf32>
    %20 = arith.mulf %0, %19 : vector<8x30xf32>
    %cst_5 = arith.constant dense<0.000000e+00> : vector<8xf32>
    %21 = vector.multi_reduction <add>, %20, %cst_5 [1] : vector<8x30xf32> to vector<8xf32>
    %22 = vector.shape_cast %21 : vector<8xf32> to vector<8x1xf32>
    %c2 = arith.constant 2 : index
    %23 = memref.load %arg3[%c2] : memref<3xf32, #tpu.memory_space<smem>>
    %24 = vector.broadcast %23 : f32 to vector<8x1xf32>
    %25 = arith.addf %22, %24 : vector<8x1xf32>
    %26 = arith.maximumf %9, %17 : vector<8x1xf32>
    %27 = arith.maximumf %26, %25 : vector<8x1xf32>
    %28 = arith.subf %9, %27 : vector<8x1xf32>
    %29 = math.exp %28 : vector<8x1xf32>
    %30 = arith.subf %17, %27 : vector<8x1xf32>
    %31 = math.exp %30 : vector<8x1xf32>
    %32 = arith.subf %25, %27 : vector<8x1xf32>
    %33 = math.exp %32 : vector<8x1xf32>
    %34 = arith.addf %29, %31 : vector<8x1xf32>
    %35 = arith.addf %34, %33 : vector<8x1xf32>
    %36 = tpu.reciprocal %35 : vector<8x1xf32> -> vector<8x1xf32>
    %37 = arith.mulf %29, %36 : vector<8x1xf32>
    %c0_6 = arith.constant 0 : index
    %c0_7 = arith.constant 0 : index
    %38 = vector.load %arg4[%c0_6, %c0_7] : memref<8x3xf32, #tpu.memory_space<vmem>>, vector<8x1xf32>
    tpu.vector_store %arg4[%c0_6, %c0_7], %37 {strides = array<i32>} : memref<8x3xf32, #tpu.memory_space<vmem>>, vector<8x1xf32>,
    %39 = arith.mulf %31, %36 : vector<8x1xf32>
    %c0_8 = arith.constant 0 : index
    %c1_9 = arith.constant 1 : index
    %40 = vector.load %arg4[%c0_8, %c1_9] : memref<8x3xf32, #tpu.memory_space<vmem>>, vector<8x1xf32>
    tpu.vector_store %arg4[%c0_8, %c1_9], %39 {strides = array<i32>} : memref<8x3xf32, #tpu.memory_space<vmem>>, vector<8x1xf32>,
    %41 = arith.mulf %33, %36 : vector<8x1xf32>
    %c0_10 = arith.constant 0 : index
    %c2_11 = arith.constant 2 : index
    %42 = vector.load %arg4[%c0_10, %c2_11] : memref<8x3xf32, #tpu.memory_space<vmem>>, vector<8x1xf32>
    tpu.vector_store %arg4[%c0_10, %c2_11], %41 {strides = array<i32>} : memref<8x3xf32, #tpu.memory_space<vmem>>, vector<8x1xf32>,
    return
  }
  func.func @transform_0(%arg0: i32) -> (i32, i32) {
    %c0_i32 = arith.constant 0 : i32
    %c0_i32_0 = arith.constant 0 : i32
    return %arg0, %c0_i32 : i32, i32
  }
  func.func @transform_1(%arg0: i32) -> (i32, i32) {
    %c0_i32 = arith.constant 0 : i32
    %c0_i32_0 = arith.constant 0 : i32
    %c0_i32_1 = arith.constant 0 : i32
    return %c0_i32, %c0_i32_0 : i32, i32
  }
  func.func @transform_2(%arg0: i32) -> i32 {
    %c0_i32 = arith.constant 0 : i32
    %c0_i32_0 = arith.constant 0 : i32
    return %c0_i32 : i32
  }
  func.func @transform_3(%arg0: i32) -> (i32, i32) {
    %c0_i32 = arith.constant 0 : i32
    %c0_i32_0 = arith.constant 0 : i32
    return %arg0, %c0_i32 : i32, i32
  }
}

</mosaic_0001>

<llo_original>
// kernel: tpu_custom_call.1
$region0: #{tpu_custom_call.1}
  #allocation0 [shape = 'u32[]', space=smem, size = 0x4, offset = 0x4, fixed_abs, tag = 'smem constant byte address 0x4 - core index']
  #allocation1 [shape = 'u32[144,128]{1,0:T(1,128)}', space=vmem, size = 0x12000, scoped, tag = 'internal scratch']
  %s0 = inlined_call_operand.hbm [shape: f32[8,30], index: 0, kind: input, shape index: {}]
  %s1 = inlined_call_operand.hbm [shape: f32[3,30], index: 1, kind: input, shape index: {}]
  %s2 = inlined_call_operand.vmem [shape: f32[3], index: 2, kind: input, shape index: {}]
  %s3 = inlined_call_operand.vmem [shape: f32[8,3], index: 3, kind: output, shape index: {}]
  %s4 = sld [smem:[#allocation0]]
  $region34: #{tpu_custom_call.1} parent=0
    _
  %s6 = ssub.s32 1, %s4
  %s7 = scalar_select 0, %s6, %s4
  $region1: #{tpu_custom_call.1} parent=0
    #allocation2 [shape = 'u8[4096]{0}', space=vmem, size = 0x1000, scoped, tag = 'input window, operand 0, single buffered']
    #allocation3 [shape = 's32[1]{0}', space=sflag, size = 0x4, scoped, tag = 'scoped memory for tpu_custom_call.1']
    #allocation4 [shape = 's32[1]{0}', space=sflag, size = 0x4, scoped, tag = 'scoped memory for tpu_custom_call.1']
    #allocation5 [shape = 'u8[2048]{0}', space=vmem, size = 0x800, scoped, tag = 'input window, operand 1, single buffered']
    #allocation6 [shape = 's32[1]{0}', space=sflag, size = 0x4, scoped, tag = 'scoped memory for tpu_custom_call.1']
    #allocation7 [shape = 'u8[512]{0}', space=smem, size = 0x200, scoped, tag = 'input window, operand 2, single buffered']
    %8 = vsyncpa [#allocation3], 0
    %9 = vsyncpa [#allocation6], 0
    %10 = vsyncpa [#allocation4], 0
    // Predicated region
    $region2: #{tpu_custom_call.1} parent=1 // pred_check
      _
    $region3: #{tpu_custom_call.1} parent=1 // pred_check_branch
      %12 = sbr.rel (0) target = $region5
    $region4: #{tpu_custom_call.1} parent=1 // pred_region
      %s14 = ssub.s32 128, 128
      %15 = vsyncadd [#allocation3], %s14
      %s17 = sshll.u32 [#allocation2], 4
      %s18 = int_to_ptr.vmem [resolvable:$true] %s17
      %20 = dma.hbm_to_vmem [thread:$0]  %s0, 128, %s18, [#allocation3]
    $region5: #{tpu_custom_call.1} parent=1 // pred_fallthru
      _
    // Predicated region
    $region6: #{tpu_custom_call.1} parent=1 // pred_check
      _
    $region7: #{tpu_custom_call.1} parent=1 // pred_check_branch
      %22 = sbr.rel (0) target = $region9
    $region8: #{tpu_custom_call.1} parent=1 // pred_region
      %s24 = ssub.s32 64, 64
      %25 = vsyncadd [#allocation6], %s24
      %s27 = sshll.u32 [#allocation5], 4
      %s28 = int_to_ptr.vmem [resolvable:$true] %s27
      %30 = dma.hbm_to_vmem [thread:$0]  %s1, 64, %s28, [#allocation6]
    $region9: #{tpu_custom_call.1} parent=1 // pred_fallthru
      _
    // Predicated region
    $region10: #{tpu_custom_call.1} parent=1 // pred_check
      _
    $region11: #{tpu_custom_call.1} parent=1 // pred_check_branch
      %32 = sbr.rel (0) target = $region13
    $region12: #{tpu_custom_call.1} parent=1 // pred_region
      %s34 = ssub.s32 16, 16
      %35 = vsyncadd [#allocation4], %s34
      %s37 = sshll.u32 %s2, 4
      %s38 = int_to_ptr.vmem [resolvable:$true] %s37
      %40 = dma.vmem_to_smem %s38, 16, [#allocation7], [#allocation4]
    $region13: #{tpu_custom_call.1} parent=1 // pred_fallthru
      _
    // Predicated region
    $region14: #{tpu_custom_call.1} parent=1 // pred_check
      _
    $region15: #{tpu_custom_call.1} parent=1 // pred_check_branch
      %42 = sbr.rel (0) target = $region17
    $region16: #{tpu_custom_call.1} parent=1 // pred_region
      %43 = dma.done [#allocation3], 128
    $region17: #{tpu_custom_call.1} parent=1 // pred_fallthru
      _
    // Predicated region
    $region18: #{tpu_custom_call.1} parent=1 // pred_check
      _
    $region19: #{tpu_custom_call.1} parent=1 // pred_check_branch
      %45 = sbr.rel (0) target = $region21
    $region20: #{tpu_custom_call.1} parent=1 // pred_region
      %46 = dma.done [#allocation6], 64
    $region21: #{tpu_custom_call.1} parent=1 // pred_fallthru
      _
    // Predicated region
    $region22: #{tpu_custom_call.1} parent=1 // pred_check
      _
    $region23: #{tpu_custom_call.1} parent=1 // pred_check_branch
      %48 = sbr.rel (0) target = $region25
    $region24: #{tpu_custom_call.1} parent=1 // pred_region
      %49 = dma.done [#allocation4], 16
    $region25: #{tpu_custom_call.1} parent=1 // pred_fallthru
      _
    %50 = sfence
    %v51 = vld [vmem:[#allocation2] sm:$0xff]
    %v52 = vld [vmem:[#allocation5] sm:$0x7]
    %v53 = vlaneseq
    %v54 = vshrl.u32 %v53, 7
    %v55 = vsub.s32 0, %v54
    %v56 = vrot.slane %v52, %v55
    %v57 = vmul.f32 %v51, %v56
    %vm58 = vcmask 244736
    %v59 = vsel %vm58, %v57, 0.0
    %60 = vadd.xlane.f32.xlu0 %v59
    %v61 = vpop.xlane.xlu0 %60
    %s62 = sld [smem:[#allocation7]]
    %v63 = vstv %s62
    %v64 = vadd.f32 %v61, %v63
    %v65 = vlaneseq
    %v66 = vshrl.u32 %v65, 7
    %v67 = vsub.s32 1, %v66
    %v68 = vrot.slane %v52, %v67
    %v69 = vmul.f32 %v51, %v68
    %v70 = vsel %vm58, %v69, 0.0
    %71 = vadd.xlane.f32.xlu0 %v70
    %v72 = vpop.xlane.xlu0 %71
    %s73 = sld [smem:[#allocation7 + $0x1]]
    %v74 = vstv %s73
    %v75 = vadd.f32 %v72, %v74
    %v76 = vlaneseq
    %v77 = vshrl.u32 %v76, 7
    %v78 = vsub.s32 2, %v77
    %v79 = vrot.slane %v52, %v78
    %v80 = vmul.f32 %v51, %v79
    %v81 = vsel %vm58, %v80, 0.0
    %82 = vadd.xlane.f32.xlu0 %v81
    %v83 = vpop.xlane.xlu0 %82
    %s84 = sld [smem:[#allocation7 + $0x2]]
    %v85 = vstv %s84
    %v86 = vadd.f32 %v83, %v85
    %v87 = vmax.f32 %v64, %v75
    %v88 = vmax.f32 %v87, %v86
    %v89 = vsub.f32 %v64, %v88
    %v90 = vmul.f32 %v89, 1.442695
    %v91 = vpow.pop %v90
    %v92 = vsub.f32 %v75, %v88
    %v93 = vmul.f32 %v92, 1.442695
    %v94 = vpow.pop %v93
    %v95 = vsub.f32 %v86, %v88
    %v96 = vmul.f32 %v95, 1.442695
    %v97 = vpow.pop %v96
    %v98 = vadd.f32 %v91, %v94
    %v99 = vadd.f32 %v98, %v97
    %v100 = vrcp.pop %v99
    %v101 = vmul.f32 %v91, %v100
    %vm102 = vcmask 7168
    %103 = vst.msk [vmem:[%s3] sm:$0xff] %vm102, %v101
    %v104 = vmul.f32 %v94, %v100
    %vm105 = vcmask 15368
    %106 = vst.msk [vmem:[%s3] sm:$0xff] %vm105, %v104
    %v107 = vmul.f32 %v97, %v100
    %vm108 = vcmask 23568
    %109 = vst.msk [vmem:[%s3] sm:$0xff] %vm108, %v107
    // Predicated region
    $region26: #{tpu_custom_call.1} parent=1 // pred_check
      _
    $region27: #{tpu_custom_call.1} parent=1 // pred_check_branch
      %111 = sbr.rel (0) target = $region29
    $region28: #{tpu_custom_call.1} parent=1 // pred_region
      _
    $region29: #{tpu_custom_call.1} parent=1 // pred_fallthru
      _
    // Predicated region
    $region30: #{tpu_custom_call.1} parent=1 // pred_check
      _
    $region31: #{tpu_custom_call.1} parent=1 // pred_check_branch
      %113 = sbr.rel (0) target = $region33
    $region32: #{tpu_custom_call.1} parent=1 // pred_region
      _
    $region33: #{tpu_custom_call.1} parent=1 // pred_fallthru
      _
    %114 = vsyncpa [#allocation3], 1
    %115 = vsyncpa [#allocation6], 1
    %116 = vsyncpa [#allocation4], 1

</llo_original>
